<compile_context>
chip_gen: v7x
topology: tpu7x:2x2x1
jax: 0.10.0
libtpu: 0.0.40
codegen_flags: <defaults>
</compile_context>

<pallas_src>
import functools

import jax
import jax.numpy as jnp
from jax import lax
from jax.experimental import pallas as pl
from jax.experimental.pallas import tpu as pltpu


def _round_up(x, m):
    return ((x + m - 1) // m) * m


def _vmem_budgets():
    """(tile budget, scoped vmem limit) chosen per TPU generation."""
    cap = None
    try:
        info = pltpu.get_tpu_info()
        cap = int(getattr(info, "vmem_capacity_bytes", 0)) or None
    except Exception:
        cap = None
    if cap is None:
        cap = 64 * 1024 * 1024  # conservative fallback (v7x per-TC VMEM)
    if cap >= 128 * 1024 * 1024:            # v5e / v6e
        return 44 * 1024 * 1024, 96 * 1024 * 1024
    return 24 * 1024 * 1024, 44 * 1024 * 1024   # v7x (64 MiB per TC)


def _choose_tk(m_rows, k, itemsize, resident_bytes, budget_bytes):
    """Lane-aligned K tile: 2x(M, tk) pipeline buffers + resident state must
    fit under the generation budget. Never wider than the array itself."""
    if k <= 128:
        return int(k)                        # single full-width block
    avail = max(budget_bytes - resident_bytes, 2 * m_rows * 128 * itemsize)
    tk_cap = max(128, (avail // (2 * m_rows * itemsize)) // 128 * 128)
    return int(min(8192, tk_cap, (k // 128) * 128))


def _pad_rows(m):
    """Lane/sublane-dense accumulator rows, but only when the extra streamed
    F bytes stay small (<= ~12.5%)."""
    m128 = _round_up(m, 128)
    if (m128 - m) * 8 <= m:
        return m128
    m8 = _round_up(m, 8)
    if (m8 - m) * 8 <= m:
        return m8
    return m


def _masked_tile(f_ref, kk, tk, k_total, mask_tail):
    f = f_ref[...]
    if mask_tail:  # static python bool; only emitted when K % tk != 0
        col = lax.broadcasted_iota(jnp.int32, f.shape, 1) + kk * tk
        f = jnp.where(col < k_total, f, 0).astype(f.dtype)
    return f


def _gram_kernel(f_ref, g_ref, acc_ref, *, inv_norm, k_total, tk, mask_tail):
    """Accumulate F_tile @ F_tile^T over the K grid; scale on the last step."""
    kk = pl.program_id(0)
    f = _masked_tile(f_ref, kk, tk, k_total, mask_tail)
    part = lax.dot_general(f, f, (((1,), (1,)), ((), ())),
                           preferred_element_type=jnp.float32)

    @pl.when(kk == 0)
    def _():
        acc_ref[...] = part

    @pl.when(kk > 0)
    def _():
        acc_ref[...] += part

    @pl.when(kk == pl.num_programs(0) - 1)
    def _():
        g_ref[...] = acc_ref[...] * inv_norm


def _style_loss_kernel(w_ref, f_ref, tgt_ref, loss_ref, acc_ref, *,
                       inv_norm, inv_mm, k_total, tk, mask_tail):
    """Fused: gram accumulation over K, then weight * mean((G - T)^2)."""
    kk = pl.program_id(0)
    f = _masked_tile(f_ref, kk, tk, k_total, mask_tail)
    part = lax.dot_general(f, f, (((1,), (1,)), ((), ())),
                           preferred_element_type=jnp.float32)

    @pl.when(kk == 0)
    def _():
        acc_ref[...] = part

    @pl.when(kk > 0)
    def _():
        acc_ref[...] += part

    @pl.when(kk == pl.num_programs(0) - 1)
    def _():
        g = acc_ref[...] * inv_norm
        diff = g - tgt_ref[...].astype(jnp.float32)
        mse = jnp.sum(diff * diff) * inv_mm
        loss_ref[...] = jnp.reshape(w_ref[0] * mse, (1, 1))


def _prep_features(x, precision):
    a, b, c, d = x.shape
    m, k = a * b, c * d
    feats = x.reshape(m, k)
    if precision == "bf16" and feats.dtype == jnp.float32:
        feats = feats.astype(jnp.bfloat16)   # halves streamed HBM bytes
    m_rows = _pad_rows(m)
    if m_rows != m:
        feats = jnp.pad(feats, ((0, m_rows - m), (0, 0)))  # zero rows: gram rows/cols = 0
    return feats, m, k, m_rows


def gram_matrix(x, *, precision="f32"):
    """Pallas equivalent of the PyTorch gram_matrix(x) for NCHW x."""
    feats, m, k, m_rows = _prep_features(x, precision)
    itemsize = feats.dtype.itemsize
    budget, vlimit = _vmem_budgets()

    # resident across the K grid: f32 accumulator + double-buffered (M, M) output
    resident = 3 * m_rows * m_rows * 4
    tk = _choose_tk(m_rows, k, itemsize, resident, budget)
    n_k = pl.cdiv(k, tk)
    mask_tail = (k % tk) != 0
    vlimit = int(max(vlimit, resident + 4 * m_rows * tk * itemsize + (2 << 20)))

    kernel = functools.partial(_gram_kernel, inv_norm=1.0 / float(m * k),
                               k_total=k, tk=tk, mask_tail=mask_tail)
    g = pl.pallas_call(
        kernel,
        out_shape=jax.ShapeDtypeStruct((m_rows, m_rows), jnp.float32),
        grid=(n_k,),
        in_specs=[pl.BlockSpec((m_rows, tk), lambda kk: (0, kk))],
        out_specs=pl.BlockSpec((m_rows, m_rows), lambda kk: (0, 0)),
        scratch_shapes=[pltpu.VMEM((m_rows, m_rows), jnp.float32)],
        compiler_params=pltpu.CompilerParams(
            dimension_semantics=("arbitrary",),
            vmem_limit_bytes=vlimit),
        cost_estimate=pl.CostEstimate(
            flops=2 * m_rows * m_rows * n_k * tk,
            bytes_accessed=m_rows * k * itemsize + m_rows * m_rows * 4,
            transcendentals=0),
    )(feats)
    if m_rows != m:
        g = g[:m, :m]
    return g


def style_loss_forward(x, target_gram, weight, *, precision="f32"):
    """Forward pass of StyleLoss: scalar loss = weight * mse(gram(x), target)."""
    feats, m, k, m_rows = _prep_features(x, precision)
    itemsize = feats.dtype.itemsize
    budget, vlimit = _vmem_budgets()

    tgt = jnp.asarray(target_gram, jnp.float32)
    if m_rows != m:
        # pad target like the gram; padded rows/cols are zero on both sides so
        # the MSE sum is unchanged; inv_mm below stays 1/(true M)^2.
        tgt = jnp.pad(tgt, ((0, m_rows - m), (0, m_rows - m)))

    # resident across the K grid: f32 accumulator + double-buffered (M, M) target
    resident = 3 * m_rows * m_rows * 4
    tk = _choose_tk(m_rows, k, itemsize, resident, budget)
    n_k = pl.cdiv(k, tk)
    mask_tail = (k % tk) != 0
    vlimit = int(max(vlimit, resident + 4 * m_rows * tk * itemsize + (2 << 20)))

    w = jnp.asarray(weight, jnp.float32).reshape(1)  # SMEM scalar, no recompile
    kernel = functools.partial(
        _style_loss_kernel,
        inv_norm=1.0 / float(m * k),
        inv_mm=1.0 / float(m * m),
        k_total=k, tk=tk, mask_tail=mask_tail)

    out = pl.pallas_call(
        kernel,
        out_shape=jax.ShapeDtypeStruct((1, 1), jnp.float32),
        grid=(n_k,),
        in_specs=[
            pl.BlockSpec(memory_space=pltpu.MemorySpace.SMEM),   # weight scalar
            pl.BlockSpec((m_rows, tk), lambda kk: (0, kk)),      # streamed F tiles
            pl.BlockSpec((m_rows, m_rows), lambda kk: (0, 0)),   # resident target
        ],
        out_specs=pl.BlockSpec((1, 1), lambda kk: (0, 0)),
        scratch_shapes=[pltpu.VMEM((m_rows, m_rows), jnp.float32)],
        compiler_params=pltpu.CompilerParams(
            dimension_semantics=("arbitrary",),
            vmem_limit_bytes=vlimit),
        cost_estimate=pl.CostEstimate(
            flops=2 * m_rows * m_rows * n_k * tk,
            bytes_accessed=m_rows * k * itemsize + 2 * m_rows * m_rows * 4 + 4,
            transcendentals=0),
    )(w, feats, tgt)
    return out[0, 0]


class StyleLoss:
    """JAX/Pallas port of the PyTorch StyleLoss module (forward only)."""

    def __init__(self, weight, target_feature, *, precision="f32"):
        # target gram computed once at init ("detached": no grads flow here)
        self.precision = precision
        self.target = gram_matrix(target_feature, precision=precision)
        self.weight = float(weight)

    def __call__(self, x):
        return style_loss_forward(x, self.target, self.weight,
                                  precision=self.precision)


def _reference_loss(x, target_feature, weight):
    """Pure-JAX f32 reference for correctness check."""
    def gram(t):
        a, b, c, d = t.shape
        f = t.reshape(a * b, c * d).astype(jnp.float32)
        return (f @ f.T) / (a * b * c * d)

    g = gram(x)
    tgt = gram(target_feature)
    return weight * jnp.mean((g - tgt) ** 2)


if __name__ == "__main__":
    key = jax.random.PRNGKey(0)
    k1, k2, k3, k4 = jax.random.split(key, 4)
    weight = 1000.0  # deterministic synthetic style weight

    # Case 1: NCHW batch=2, channels=4, spatial 16x16 (K = 256, lane-aligned).
    x = jax.random.normal(k1, (2, 4, 16, 16), dtype=jnp.float32)
    target_feature = jax.random.normal(k2, (2, 4, 16, 16), dtype=jnp.float32)
    module = StyleLoss(weight, target_feature)
    loss = jax.block_until_ready(module(x))
    ref = jax.block_until_ready(_reference_loss(x, target_feature, weight))
    assert jnp.allclose(loss, ref, rtol=1e-5, atol=1e-5), (loss, ref)

    # Case 2: spatial 12x12 (K = 144, not a multiple of the 128-wide tile):
    # exercises the cdiv grid + in-kernel tail masking (no jnp.pad HBM copy).
    x2 = jax.random.normal(k3, (2, 4, 12, 12), dtype=jnp.float32)
    target_feature2 = jax.random.normal(k4, (2, 4, 12, 12), dtype=jnp.float32)
    module2 = StyleLoss(weight, target_feature2)
    loss2 = jax.block_until_ready(module2(x2))
    ref2 = jax.block_until_ready(_reference_loss(x2, target_feature2, weight))
    assert jnp.allclose(loss2, ref2, rtol=1e-5, atol=1e-5), (loss2, ref2)

    # Case 3: bf16-streamed variant (bandwidth optimization; looser numerics).
    module_bf16 = StyleLoss(weight, target_feature, precision="bf16")
    loss_bf16 = jax.block_until_ready(module_bf16(x))
    assert jnp.allclose(loss_bf16, ref, rtol=5e-2, atol=1e-3), (loss_bf16, ref)

    print("KERNEL_OK")
</pallas_src>

<mosaic_0001>
module attributes {stable_mosaic.version = 11 : i64} {
  func.func @_gram_kernel(%arg0: i32, %arg1: memref<8x256xf32, #tpu.memory_space<vmem>>, %arg2: memref<8x8xf32, #tpu.memory_space<vmem>>, %arg3: memref<8x8xf32, #tpu.memory_space<vmem>>) attributes {dimension_semantics = [#tpu.dimension_semantics<arbitrary>], iteration_bounds = array<i64: 1>, scalar_prefetch = 0 : i64, scratch_operands = 1 : i64, tpu.core_type = #tpu.core_type<tc>, window_params = [{transform_indices = @transform_0, window_bounds = array<i64: 8, 256>}, {pipeline_mode = #tpu.pipeline_mode<synchronous>, transform_indices = @transform_1, window_bounds = array<i64: 8, 8>}]} {
    %c0 = arith.constant 0 : index
    %c0_0 = arith.constant 0 : index
    %0 = vector.load %arg1[%c0, %c0_0] : memref<8x256xf32, #tpu.memory_space<vmem>>, vector<8x256xf32>
    %cst = arith.constant dense<0.000000e+00> : vector<8x8xf32>
    %1 = tpu.matmul %0, %0, %cst {dimension_numbers = #tpu.dot_dimension_numbers<[1], [1], [0], [0], [0, 0, 1, 0], [], []>} : vector<8x256xf32>, vector<8x256xf32>, vector<8x8xf32> -> vector<8x8xf32>
    %c0_i32 = arith.constant 0 : i32
    %2 = arith.cmpi eq, %arg0, %c0_i32 : i32
    %3 = arith.extui %2 : i1 to i32
    %c0_i32_1 = arith.constant 0 : i32
    %4 = arith.cmpi ne, %3, %c0_i32_1 : i32
    scf.if %4 {
      %c0_6 = arith.constant 0 : index
      %c0_7 = arith.constant 0 : index
      %11 = vector.load %arg3[%c0_6, %c0_7] : memref<8x8xf32, #tpu.memory_space<vmem>>, vector<8x8xf32>
      tpu.vector_store %arg3[%c0_6, %c0_7], %1 {strides = array<i32>} : memref<8x8xf32, #tpu.memory_space<vmem>>, vector<8x8xf32>,
    } else {
    }
    %c0_i32_2 = arith.constant 0 : i32
    %5 = arith.cmpi sgt, %arg0, %c0_i32_2 : i32
    %6 = arith.extui %5 : i1 to i32
    %c0_i32_3 = arith.constant 0 : i32
    %7 = arith.cmpi ne, %6, %c0_i32_3 : i32
    scf.if %7 {
      %c0_6 = arith.constant 0 : index
      %c0_7 = arith.constant 0 : index
      %11 = vector.load %arg3[%c0_6, %c0_7] : memref<8x8xf32, #tpu.memory_space<vmem>>, vector<8x8xf32>
      %12 = arith.addf %11, %1 : vector<8x8xf32>
      %c0_8 = arith.constant 0 : index
      %c0_9 = arith.constant 0 : index
      %13 = vector.load %arg3[%c0_8, %c0_9] : memref<8x8xf32, #tpu.memory_space<vmem>>, vector<8x8xf32>
      tpu.vector_store %arg3[%c0_8, %c0_9], %12 {strides = array<i32>} : memref<8x8xf32, #tpu.memory_space<vmem>>, vector<8x8xf32>,
    } else {
    }
    %c0_i32_4 = arith.constant 0 : i32
    %8 = arith.cmpi eq, %arg0, %c0_i32_4 : i32
    %9 = arith.extui %8 : i1 to i32
    %c0_i32_5 = arith.constant 0 : i32
    %10 = arith.cmpi ne, %9, %c0_i32_5 : i32
    scf.if %10 {
      %c0_6 = arith.constant 0 : index
      %c0_7 = arith.constant 0 : index
      %11 = vector.load %arg3[%c0_6, %c0_7] : memref<8x8xf32, #tpu.memory_space<vmem>>, vector<8x8xf32>
      %cst_8 = arith.constant 4.8828125E-4 : f32
      %12 = vector.broadcast %cst_8 : f32 to vector<8x8xf32>
      %13 = arith.mulf %11, %12 : vector<8x8xf32>
      %c0_9 = arith.constant 0 : index
      %c0_10 = arith.constant 0 : index
      %14 = vector.load %arg2[%c0_9, %c0_10] : memref<8x8xf32, #tpu.memory_space<vmem>>, vector<8x8xf32>
      tpu.vector_store %arg2[%c0_9, %c0_10], %13 {strides = array<i32>} : memref<8x8xf32, #tpu.memory_space<vmem>>, vector<8x8xf32>,
    } else {
    }
    return
  }
  func.func @transform_0(%arg0: i32) -> (i32, i32) {
    %c0_i32 = arith.constant 0 : i32
    %c0_i32_0 = arith.constant 0 : i32
    return %c0_i32, %arg0 : i32, i32
  }
  func.func @transform_1(%arg0: i32) -> (i32, i32) {
    %c0_i32 = arith.constant 0 : i32
    %c0_i32_0 = arith.constant 0 : i32
    %c0_i32_1 = arith.constant 0 : i32
    return %c0_i32, %c0_i32_0 : i32, i32
  }
}

</mosaic_0001>

<llo_original>
// kernel: tpu_custom_call.1
$region0: #{tpu_custom_call.1}
  #allocation0 [shape = 'u32[]', space=smem, size = 0x4, offset = 0x4, fixed_abs, tag = 'smem constant byte address 0x4 - core index']
  #allocation1 [shape = 'u32[144,128]{1,0:T(1,128)}', space=vmem, size = 0x12000, scoped, tag = 'internal scratch']
  #allocation2 [shape = 'f32[8,8]{1,0:T(8,128)}', space=vmem, size = 0x1000, scoped, tag = 'scratch operand']
  %s0 = inlined_call_operand.hbm [shape: f32[8,256], index: 0, kind: input, shape index: {}]
  %s1 = inlined_call_operand.hbm [shape: f32[8,8], index: 1, kind: output, shape index: {}]
  %s2 = sld [smem:[#allocation0]]
  $region30: #{tpu_custom_call.1} parent=0
    _
  %s4 = ssub.s32 1, %s2
  %s5 = scalar_select 0, %s4, %s2
  $region1: #{tpu_custom_call.1} parent=0
    #allocation3 [shape = 'u8[8192]{0}', space=vmem, size = 0x2000, scoped, tag = 'input window, operand 0, single buffered']
    #allocation4 [shape = 's32[1]{0}', space=sflag, size = 0x4, scoped, tag = 'scoped memory for tpu_custom_call.1']
    #allocation5 [shape = 's32[1]{0}', space=sflag, size = 0x4, scoped, tag = 'scoped memory for tpu_custom_call.1']
    #allocation6 [shape = 'u8[4096]{0}', space=vmem, size = 0x1000, scoped, tag = 'output window, operand 0, single buffered']
    %6 = vsyncpa [#allocation4], 0
    %7 = vsyncpa [#allocation5], 0
    // Predicated region
    $region2: #{tpu_custom_call.1} parent=1 // pred_check
      _
    $region3: #{tpu_custom_call.1} parent=1 // pred_check_branch
      %9 = sbr.rel (0) target = $region5
    $region4: #{tpu_custom_call.1} parent=1 // pred_region
      %s11 = ssub.s32 256, 256
      %12 = vsyncadd [#allocation4], %s11
      %s14 = sshll.u32 [#allocation3], 4
      %s15 = int_to_ptr.vmem [resolvable:$true] %s14
      %17 = dma.hbm_to_vmem [thread:$0]  %s0, 256, %s15, [#allocation4]
    $region5: #{tpu_custom_call.1} parent=1 // pred_fallthru
      _
    // Predicated region
    $region6: #{tpu_custom_call.1} parent=1 // pred_check
      _
    $region7: #{tpu_custom_call.1} parent=1 // pred_check_branch
      %19 = sbr.rel (0) target = $region9
    $region8: #{tpu_custom_call.1} parent=1 // pred_region
      %20 = dma.done [#allocation4], 256
    $region9: #{tpu_custom_call.1} parent=1 // pred_fallthru
      _
    %v21 = vld [vmem:[#allocation3] sm:$0xff]
    %v22 = vld [vmem:[#allocation3 + $0x8] sm:$0xff]
    %23 = vmatprep.subr.mxu0 %v22
    %24 = vmatpush1.xpose.msra.mxu0 %v21
    %25 = vmatprep.subr.mxu0 0.0
    %26 = vmatpush1.xpose.msra.mxu0 0.0
    %27 = vmatprep.subr.mxu0 0.0
    %28 = vmatpush1.xpose.msra.mxu0 0.0
    %29 = vmatprep.subr.mxu0 0.0
    %30 = vmatpush1.xpose.msra.mxu0 0.0
    %31 = vmatprep.subr.mxu0 0.0
    %32 = vmatpush1.xpose.msra.mxu0 0.0
    %33 = vmatprep.subr.mxu0 0.0
    %34 = vmatpush1.xpose.msra.mxu0 0.0
    %35 = vmatprep.subr.mxu0 0.0
    %36 = vmatpush1.xpose.msra.mxu0 0.0
    %37 = vmatprep.subr.mxu0 0.0
    %38 = vmatpush1.xpose.msra.mxu0 0.0
    %39 = vmatprep.subr.mxu0 0.0
    %40 = vmatpush1.xpose.msra.mxu0 0.0
    %41 = vmatprep.subr.mxu0 0.0
    %42 = vmatpush1.xpose.msra.mxu0 0.0
    %43 = vmatprep.subr.mxu0 0.0
    %44 = vmatpush1.xpose.msra.mxu0 0.0
    %45 = vmatprep.subr.mxu0 0.0
    %46 = vmatpush1.xpose.msra.mxu0 0.0
    %47 = vmatprep.subr.mxu0 0.0
    %48 = vmatpush1.xpose.msra.mxu0 0.0
    %49 = vmatprep.subr.mxu0 0.0
    %50 = vmatpush1.xpose.msra.mxu0 0.0
    %51 = vmatprep.subr.mxu0 0.0
    %52 = vmatpush1.xpose.msra.mxu0 0.0
    %53 = vmatprep.subr.mxu0 0.0
    %54 = vmatpush1.xpose.msra.mxu0 0.0
    %55 = vmatprep.subr.mxu0 0.0
    %56 = vmatpush1.xpose.msra.mxu0 0.0
    %57 = vmatprep.subr.mxu0 0.0
    %58 = vmatpush1.xpose.msra.mxu0 0.0
    %59 = vmatprep.subr.mxu0 0.0
    %60 = vmatpush1.xpose.msra.mxu0 0.0
    %61 = vmatprep.subr.mxu0 0.0
    %62 = vmatpush1.xpose.msra.mxu0 0.0
    %63 = vmatprep.subr.mxu0 0.0
    %64 = vmatpush1.xpose.msra.mxu0 0.0
    %65 = vmatprep.subr.mxu0 0.0
    %66 = vmatpush1.xpose.msra.mxu0 0.0
    %67 = vmatprep.subr.mxu0 0.0
    %68 = vmatpush1.xpose.msra.mxu0 0.0
    %69 = vmatprep.subr.mxu0 0.0
    %70 = vmatpush1.xpose.msra.mxu0 0.0
    %71 = vmatprep.subr.mxu0 0.0
    %72 = vmatpush1.xpose.msra.mxu0 0.0
    %73 = vmatprep.subr.mxu0 0.0
    %74 = vmatpush1.xpose.msra.mxu0 0.0
    %75 = vmatprep.subr.mxu0 0.0
    %76 = vmatpush1.xpose.msra.mxu0 0.0
    %77 = vmatprep.subr.mxu0 0.0
    %78 = vmatpush1.xpose.msra.mxu0 0.0
    %79 = vmatprep.subr.mxu0 0.0
    %80 = vmatpush1.xpose.msra.mxu0 0.0
    %81 = vmatprep.subr.mxu0 0.0
    %82 = vmatpush1.xpose.msra.mxu0 0.0
    %83 = vmatprep.subr.mxu0 0.0
    %84 = vmatpush1.xpose.msra.mxu0 0.0
    %85 = vmatprep.subr.mxu0 0.0
    %86 = vmatpush1.xpose.msra.mxu0 0.0
    %87 = vmatprep.mubr.f32.mxu0 %v22
    %88 = vmatmul.mubr.f32.gmra.mrb[0].mxu0 %v21
    %v89 = vpop.f32.mrb[0].mxu0
    %v90 = vadd.f32 0.0, %v89
    %v91 = vpop.f32.mrb[0].mxu0
    %92 = vdwg.mxu0
    %p93 = scmp.eq.s32.totalorder 0, 0
    // Predicated region
    $region10: #{tpu_custom_call.1} parent=1 // pred_check
      %p94 = pneg %p93
    $region11: #{tpu_custom_call.1} parent=1 // pred_check_branch
      %96 = sbr.rel (%p94) target = $region13
    $region12: #{tpu_custom_call.1} parent=1 // pred_region
      %vm97 = vcmask 64512
      %98 = vst.msk [vmem:[#allocation2] sm:$0xff] %vm97, %v90
    $region13: #{tpu_custom_call.1} parent=1 // pred_fallthru
      _
    %p99 = scmp.gt.s32.totalorder 0, 0
    // Predicated region
    $region14: #{tpu_custom_call.1} parent=1 // pred_check
      %p100 = pneg %p99
    $region15: #{tpu_custom_call.1} parent=1 // pred_check_branch
      %102 = sbr.rel (%p100) target = $region17
    $region16: #{tpu_custom_call.1} parent=1 // pred_region
      %v103 = vld [vmem:[#allocation2] sm:$0xff]
      %v104 = vadd.f32 %v103, %v90
      %vm105 = vcmask 64512
      %106 = vst.msk [vmem:[#allocation2] sm:$0xff] %vm105, %v104
    $region17: #{tpu_custom_call.1} parent=1 // pred_fallthru
      _
    // Predicated region
    $region18: #{tpu_custom_call.1} parent=1 // pred_check
      %p107 = pneg %p93
    $region19: #{tpu_custom_call.1} parent=1 // pred_check_branch
      %109 = sbr.rel (%p107) target = $region21
    $region20: #{tpu_custom_call.1} parent=1 // pred_region
      %v110 = vld [vmem:[#allocation2] sm:$0xff]
      %v111 = vmul.f32 %v110, 0.00048828125
      %vm112 = vcmask 64512
      %113 = vst.msk [vmem:[#allocation6] sm:$0xff] %vm112, %v111
    $region21: #{tpu_custom_call.1} parent=1 // pred_fallthru
      _
    // Predicated region
    $region22: #{tpu_custom_call.1} parent=1 // pred_check
      _
    $region23: #{tpu_custom_call.1} parent=1 // pred_check_branch
      %115 = sbr.rel (0) target = $region25
    $region24: #{tpu_custom_call.1} parent=1 // pred_region
      %s117 = ssub.s32 128, 128
      %118 = vsyncadd [#allocation5], %s117
      %s120 = sshll.u32 [#allocation6], 4
      %s121 = int_to_ptr.vmem [resolvable:$true] %s120
      %123 = dma.vmem_to_hbm [thread:$0]  %s121, 128, %s1, [#allocation5]
    $region25: #{tpu_custom_call.1} parent=1 // pred_fallthru
      _
    // Predicated region
    $region26: #{tpu_custom_call.1} parent=1 // pred_check
      _
    $region27: #{tpu_custom_call.1} parent=1 // pred_check_branch
      %125 = sbr.rel (0) target = $region29
    $region28: #{tpu_custom_call.1} parent=1 // pred_region
      %126 = dma.done [#allocation5], 128
    $region29: #{tpu_custom_call.1} parent=1 // pred_fallthru
      _
    %127 = vsyncpa [#allocation4], 1
    %128 = vsyncpa [#allocation5], 1

</llo_original>
